<compile_context>
chip_gen: v6e
topology: v6e:2x2x1
jax: 0.10.0
libtpu: 0.0.40
codegen_flags: <defaults>
</compile_context>

<pallas_src>
import functools

import jax
import jax.numpy as jnp
from jax import lax
from jax.experimental import pallas as pl
from jax.experimental.pallas import tpu as pltpu

LANES = 128
MAX_BLK_ROWS = 4096        # 4096 x 128 f32 = 2 MiB per input block
MIN_PALLAS_ELEMS = 65536   # below this per-batch size, use the fused-jnp path


def _accum_block(p_ref, t_ref, sp_acc, st_acc, spt_acc, *, blk_rows, mask=None):
    """Fold one (blk_rows, 128) block into the three (8, 128) accumulators."""
    p = p_ref[0].astype(jnp.float32)   # (blk_rows, LANES)
    t = t_ref[0].astype(jnp.float32)
    if mask is not None:
        p = jnp.where(mask, p, 0.0)
        t = jnp.where(mask, t, 0.0)
    folds = blk_rows // 8
    pr = p.reshape(folds, 8, LANES)    # (8,128)-tile-aligned reshape: free
    tr = t.reshape(folds, 8, LANES)
    sp_acc[...] += jnp.sum(pr, axis=0)         # leading-axis sums: VPU-only
    st_acc[...] += jnp.sum(tr, axis=0)
    spt_acc[...] += jnp.sum(pr * tr, axis=0)


def _gdl_sums_kernel(p_ref, t_ref, o_ref, sp_acc, st_acc, spt_acc,
                     *, blk_rows, valid_rows, ragged):
    j = pl.program_id(1)
    last = pl.num_programs(1) - 1

    @pl.when(j == 0)
    def _init():
        sp_acc[...] = jnp.zeros_like(sp_acc)
        st_acc[...] = jnp.zeros_like(st_acc)
        spt_acc[...] = jnp.zeros_like(spt_acc)

    if ragged:
        # Unmasked fast path for all full blocks; masked path only on the last
        # (partially out-of-bounds) row-block.
        @pl.when(j < last)
        def _full_blocks():
            _accum_block(p_ref, t_ref, sp_acc, st_acc, spt_acc, blk_rows=blk_rows)

        @pl.when(j == last)
        def _ragged_block():
            row = (lax.broadcasted_iota(jnp.int32, (blk_rows, LANES), 0)
                   + j * blk_rows)
            _accum_block(p_ref, t_ref, sp_acc, st_acc, spt_acc,
                         blk_rows=blk_rows, mask=row < valid_rows)
    else:
        _accum_block(p_ref, t_ref, sp_acc, st_acc, spt_acc, blk_rows=blk_rows)

    @pl.when(j == last)
    def _epilogue():
        # One small cross-lane reduction per batch element.
        s_p = jnp.sum(sp_acc[...])
        s_t = jnp.sum(st_acc[...])
        s_pt = jnp.sum(spt_acc[...])
        r = lax.broadcasted_iota(jnp.int32, (8, LANES), 0)
        o_ref[0] = jnp.where(r == 0, s_p, jnp.where(r == 1, s_t, s_pt))


def _gdl_reference(pred, target, eps=1e-10):
    """Pure-jnp reference / small-input fallback (same math as the module)."""
    b = pred.shape[0]
    p = pred.reshape(b, -1).astype(jnp.float32)
    t = target.reshape(b, -1).astype(jnp.float32)
    w_f = 1.0 / (jnp.sum(t, axis=1) + eps) ** 2
    w_b = 1.0 / (jnp.sum(1.0 - t, axis=1) + eps) ** 2
    fg_i = w_f * jnp.sum(p * t, axis=1)
    fb_i = w_b * jnp.sum((1.0 - p) * (1.0 - t), axis=1)
    fg_tot = w_f * jnp.sum(p + t, axis=1)
    fb_tot = w_b * jnp.sum(2.0 - p - t, axis=1)
    gdl = 1.0 - 2.0 * ((fg_i + fb_i + eps) / (fg_tot + fb_tot + eps))
    return jnp.mean(gdl)


def generalized_dice_loss(pred, target, eps=1e-10, *,
                          max_blk_rows=MAX_BLK_ROWS,
                          min_pallas_elems=MIN_PALLAS_ELEMS):
    assert pred.shape == target.shape
    b = pred.shape[0]
    n = 1
    for d in pred.shape[1:]:
        n *= d

    rows = n // LANES
    if n < min_pallas_elems or rows < 16:
        # Tiny per-batch reductions: pallas_call fixed cost exceeds the work.
        return _gdl_reference(pred, target, eps)

    p2 = pred.reshape(b, n)
    t2 = target.reshape(b, n)
    n_prefix = rows * LANES

    # Row-block size: multiple of 16 (f32/bf16 tile friendly), capped for VMEM.
    blk_rows = min(max_blk_rows, rows)
    blk_rows = max(16, (blk_rows // 16) * 16)
    nblk = (rows + blk_rows - 1) // blk_rows
    ragged = (rows % blk_rows) != 0

    # Free bitcast-reshape when n % 128 == 0 (the common case); otherwise the
    # kernel runs on the 128-aligned prefix and the tail is reduced below.
    p3 = p2[:, :n_prefix].reshape(b, rows, LANES)
    t3 = t2[:, :n_prefix].reshape(b, rows, LANES)

    kernel = functools.partial(_gdl_sums_kernel, blk_rows=blk_rows,
                               valid_rows=rows, ragged=ragged)

    sums = pl.pallas_call(
        kernel,
        out_shape=jax.ShapeDtypeStruct((b, 8, LANES), jnp.float32),
        grid_spec=pltpu.PrefetchScalarGridSpec(
            num_scalar_prefetch=0,
            grid=(b, nblk),
            in_specs=[
                pl.BlockSpec((1, blk_rows, LANES), lambda i, j: (i, j, 0)),
                pl.BlockSpec((1, blk_rows, LANES), lambda i, j: (i, j, 0)),
            ],
            out_specs=pl.BlockSpec((1, 8, LANES), lambda i, j: (i, 0, 0)),
            scratch_shapes=[
                pltpu.VMEM((8, LANES), jnp.float32),
                pltpu.VMEM((8, LANES), jnp.float32),
                pltpu.VMEM((8, LANES), jnp.float32),
            ],
        ),
        compiler_params=pltpu.CompilerParams(
            dimension_semantics=("parallel", "arbitrary"),
        ),
    )(p3, t3)

    s_p = sums[:, 0, 0]
    s_t = sums[:, 1, 0]
    s_pt = sums[:, 2, 0]

    if n_prefix != n:
        # <128-element lane tail: tiny jnp reduction instead of padding both
        # full tensors in HBM.
        p_tail = p2[:, n_prefix:].astype(jnp.float32)
        t_tail = t2[:, n_prefix:].astype(jnp.float32)
        s_p = s_p + jnp.sum(p_tail, axis=1)
        s_t = s_t + jnp.sum(t_tail, axis=1)
        s_pt = s_pt + jnp.sum(p_tail * t_tail, axis=1)

    n_f = jnp.float32(n)
    w_f = 1.0 / (s_t + eps) ** 2
    w_b = 1.0 / ((n_f - s_t) + eps) ** 2
    fg_i = w_f * s_pt
    fb_i = w_b * (n_f - s_p - s_t + s_pt)
    fg_tot = w_f * (s_p + s_t)
    fb_tot = w_b * (2.0 * n_f - s_p - s_t)
    gdl = 1.0 - 2.0 * ((fg_i + fb_i + eps) / (fg_tot + fb_tot + eps))
    return jnp.mean(gdl)


if __name__ == "__main__":
    key = jax.random.PRNGKey(0)
    k1, k2, k3, k4, k5, k6 = jax.random.split(key, 6)

    def make_inputs(ka, kb, shape):
        pred = jax.nn.sigmoid(jax.random.normal(ka, shape, dtype=jnp.float32))
        target = (jax.random.uniform(kb, shape) > 0.5).astype(jnp.float32)
        return pred, target

    # 1) Small NCHW shape (B=2, C=4, H=W=16): N=1024 -> small-input fallback.
    p_s, t_s = make_inputs(k1, k2, (2, 4, 16, 16))
    out_s = jax.block_until_ready(generalized_dice_loss(p_s, t_s))
    ref_s = _gdl_reference(p_s, t_s)
    assert jnp.allclose(out_s, ref_s, rtol=1e-4, atol=1e-5), (out_s, ref_s)

    # 2) Kernel path, lane-aligned N (4*128*128 = 65536 per batch).
    #    Also force small row-blocks to exercise multi-block + ragged masking.
    p_m, t_m = make_inputs(k3, k4, (2, 4, 128, 128))
    ref_m = _gdl_reference(p_m, t_m)
    out_m = jax.block_until_ready(generalized_dice_loss(p_m, t_m))
    out_m_blk = jax.block_until_ready(
        generalized_dice_loss(p_m, t_m, max_blk_rows=96))
    assert jnp.allclose(out_m, ref_m, rtol=1e-4, atol=1e-5), (out_m, ref_m)
    assert jnp.allclose(out_m_blk, ref_m, rtol=1e-4, atol=1e-5), (out_m_blk, ref_m)

    # 3) Kernel path, lane-ragged N (4*130*131 = 68120 per batch: 24-elem tail
    #    handled in the wrapper, ragged last row-block masked in-kernel).
    p_r, t_r = make_inputs(k5, k6, (2, 4, 130, 131))
    ref_r = _gdl_reference(p_r, t_r)
    out_r = jax.block_until_ready(generalized_dice_loss(p_r, t_r))
    assert jnp.allclose(out_r, ref_r, rtol=1e-4, atol=1e-5), (out_r, ref_r)

    print("KERNEL_OK")
</pallas_src>

<mosaic_0001>
module attributes {stable_mosaic.version = 11 : i64} {
  func.func @_gdl_sums_kernel(%arg0: i32, %arg1: i32, %arg2: memref<1x512x128xf32, #tpu.memory_space<vmem>>, %arg3: memref<1x512x128xf32, #tpu.memory_space<vmem>>, %arg4: memref<1x8x128xf32, #tpu.memory_space<vmem>>, %arg5: memref<8x128xf32, #tpu.memory_space<vmem>>, %arg6: memref<8x128xf32, #tpu.memory_space<vmem>>, %arg7: memref<8x128xf32, #tpu.memory_space<vmem>>) attributes {dimension_semantics = [#tpu.dimension_semantics<parallel>, #tpu.dimension_semantics<arbitrary>], iteration_bounds = array<i64: 2, 1>, scalar_prefetch = 0 : i64, scratch_operands = 3 : i64, tpu.core_type = #tpu.core_type<tc>, window_params = [{transform_indices = @transform_0, window_bounds = array<i64: 1, 512, 128>}, {transform_indices = @transform_1, window_bounds = array<i64: 1, 512, 128>}, {transform_indices = @transform_2, window_bounds = array<i64: 1, 8, 128>}]} {
    %c0_i32 = arith.constant 0 : i32
    %0 = arith.cmpi eq, %arg1, %c0_i32 : i32
    %1 = arith.extui %0 : i1 to i32
    %c0_i32_0 = arith.constant 0 : i32
    %2 = arith.cmpi ne, %1, %c0_i32_0 : i32
    scf.if %2 {
      %cst_22 = arith.constant 0.000000e+00 : f32
      %25 = vector.broadcast %cst_22 : f32 to vector<8x128xf32>
      %c0_23 = arith.constant 0 : index
      %c0_24 = arith.constant 0 : index
      %26 = vector.load %arg5[%c0_23, %c0_24] : memref<8x128xf32, #tpu.memory_space<vmem>>, vector<8x128xf32>
      tpu.vector_store %arg5[%c0_23, %c0_24], %25 {strides = array<i32>} : memref<8x128xf32, #tpu.memory_space<vmem>>, vector<8x128xf32>,
      %cst_25 = arith.constant 0.000000e+00 : f32
      %27 = vector.broadcast %cst_25 : f32 to vector<8x128xf32>
      %c0_26 = arith.constant 0 : index
      %c0_27 = arith.constant 0 : index
      %28 = vector.load %arg6[%c0_26, %c0_27] : memref<8x128xf32, #tpu.memory_space<vmem>>, vector<8x128xf32>
      tpu.vector_store %arg6[%c0_26, %c0_27], %27 {strides = array<i32>} : memref<8x128xf32, #tpu.memory_space<vmem>>, vector<8x128xf32>,
      %cst_28 = arith.constant 0.000000e+00 : f32
      %29 = vector.broadcast %cst_28 : f32 to vector<8x128xf32>
      %c0_29 = arith.constant 0 : index
      %c0_30 = arith.constant 0 : index
      %30 = vector.load %arg7[%c0_29, %c0_30] : memref<8x128xf32, #tpu.memory_space<vmem>>, vector<8x128xf32>
      tpu.vector_store %arg7[%c0_29, %c0_30], %29 {strides = array<i32>} : memref<8x128xf32, #tpu.memory_space<vmem>>, vector<8x128xf32>,
    } else {
    }
    %c0 = arith.constant 0 : index
    %c0_1 = arith.constant 0 : index
    %c0_2 = arith.constant 0 : index
    %3 = vector.load %arg2[%c0, %c0_1, %c0_2] : memref<1x512x128xf32, #tpu.memory_space<vmem>>, vector<1x512x128xf32>
    %4 = vector.shape_cast %3 : vector<1x512x128xf32> to vector<512x128xf32>
    %c0_3 = arith.constant 0 : index
    %c0_4 = arith.constant 0 : index
    %c0_5 = arith.constant 0 : index
    %5 = vector.load %arg3[%c0_3, %c0_4, %c0_5] : memref<1x512x128xf32, #tpu.memory_space<vmem>>, vector<1x512x128xf32>
    %6 = vector.shape_cast %5 : vector<1x512x128xf32> to vector<512x128xf32>
    %7 = vector.shape_cast %4 : vector<512x128xf32> to vector<64x8x128xf32>
    %8 = vector.shape_cast %6 : vector<512x128xf32> to vector<64x8x128xf32>
    %c0_6 = arith.constant 0 : index
    %c0_7 = arith.constant 0 : index
    %9 = vector.load %arg5[%c0_6, %c0_7] : memref<8x128xf32, #tpu.memory_space<vmem>>, vector<8x128xf32>
    %cst = arith.constant dense<0.000000e+00> : vector<8x128xf32>
    %10 = vector.multi_reduction <add>, %7, %cst [0] : vector<64x8x128xf32> to vector<8x128xf32>
    %11 = arith.addf %9, %10 : vector<8x128xf32>
    %c0_8 = arith.constant 0 : index
    %c0_9 = arith.constant 0 : index
    %12 = vector.load %arg5[%c0_8, %c0_9] : memref<8x128xf32, #tpu.memory_space<vmem>>, vector<8x128xf32>
    tpu.vector_store %arg5[%c0_8, %c0_9], %11 {strides = array<i32>} : memref<8x128xf32, #tpu.memory_space<vmem>>, vector<8x128xf32>,
    %c0_10 = arith.constant 0 : index
    %c0_11 = arith.constant 0 : index
    %13 = vector.load %arg6[%c0_10, %c0_11] : memref<8x128xf32, #tpu.memory_space<vmem>>, vector<8x128xf32>
    %cst_12 = arith.constant dense<0.000000e+00> : vector<8x128xf32>
    %14 = vector.multi_reduction <add>, %8, %cst_12 [0] : vector<64x8x128xf32> to vector<8x128xf32>
    %15 = arith.addf %13, %14 : vector<8x128xf32>
    %c0_13 = arith.constant 0 : index
    %c0_14 = arith.constant 0 : index
    %16 = vector.load %arg6[%c0_13, %c0_14] : memref<8x128xf32, #tpu.memory_space<vmem>>, vector<8x128xf32>
    tpu.vector_store %arg6[%c0_13, %c0_14], %15 {strides = array<i32>} : memref<8x128xf32, #tpu.memory_space<vmem>>, vector<8x128xf32>,
    %c0_15 = arith.constant 0 : index
    %c0_16 = arith.constant 0 : index
    %17 = vector.load %arg7[%c0_15, %c0_16] : memref<8x128xf32, #tpu.memory_space<vmem>>, vector<8x128xf32>
    %18 = arith.mulf %7, %8 : vector<64x8x128xf32>
    %cst_17 = arith.constant dense<0.000000e+00> : vector<8x128xf32>
    %19 = vector.multi_reduction <add>, %18, %cst_17 [0] : vector<64x8x128xf32> to vector<8x128xf32>
    %20 = arith.addf %17, %19 : vector<8x128xf32>
    %c0_18 = arith.constant 0 : index
    %c0_19 = arith.constant 0 : index
    %21 = vector.load %arg7[%c0_18, %c0_19] : memref<8x128xf32, #tpu.memory_space<vmem>>, vector<8x128xf32>
    tpu.vector_store %arg7[%c0_18, %c0_19], %20 {strides = array<i32>} : memref<8x128xf32, #tpu.memory_space<vmem>>, vector<8x128xf32>,
    %c0_i32_20 = arith.constant 0 : i32
    %22 = arith.cmpi eq, %arg1, %c0_i32_20 : i32
    %23 = arith.extui %22 : i1 to i32
    %c0_i32_21 = arith.constant 0 : i32
    %24 = arith.cmpi ne, %23, %c0_i32_21 : i32
    scf.if %24 {
      %c0_22 = arith.constant 0 : index
      %c0_23 = arith.constant 0 : index
      %25 = vector.load %arg5[%c0_22, %c0_23] : memref<8x128xf32, #tpu.memory_space<vmem>>, vector<8x128xf32>
      %26 = vector.shape_cast %25 : vector<8x128xf32> to vector<1x8x128xf32>
      %cst_24 = arith.constant dense<0.000000e+00> : vector<1xf32>
      %27 = vector.multi_reduction <add>, %26, %cst_24 [1, 2] : vector<1x8x128xf32> to vector<1xf32>
      %28 = vector.shape_cast %27 : vector<1xf32> to vector<1x1x1xf32>
      %29 = vector.extract %28[0, 0, 0] : f32 from vector<1x1x1xf32>
      %c0_25 = arith.constant 0 : index
      %c0_26 = arith.constant 0 : index
      %30 = vector.load %arg6[%c0_25, %c0_26] : memref<8x128xf32, #tpu.memory_space<vmem>>, vector<8x128xf32>
      %31 = vector.shape_cast %30 : vector<8x128xf32> to vector<1x8x128xf32>
      %cst_27 = arith.constant dense<0.000000e+00> : vector<1xf32>
      %32 = vector.multi_reduction <add>, %31, %cst_27 [1, 2] : vector<1x8x128xf32> to vector<1xf32>
      %33 = vector.shape_cast %32 : vector<1xf32> to vector<1x1x1xf32>
      %34 = vector.extract %33[0, 0, 0] : f32 from vector<1x1x1xf32>
      %c0_28 = arith.constant 0 : index
      %c0_29 = arith.constant 0 : index
      %35 = vector.load %arg7[%c0_28, %c0_29] : memref<8x128xf32, #tpu.memory_space<vmem>>, vector<8x128xf32>
      %36 = vector.shape_cast %35 : vector<8x128xf32> to vector<1x8x128xf32>
      %cst_30 = arith.constant dense<0.000000e+00> : vector<1xf32>
      %37 = vector.multi_reduction <add>, %36, %cst_30 [1, 2] : vector<1x8x128xf32> to vector<1xf32>
      %38 = vector.shape_cast %37 : vector<1xf32> to vector<1x1x1xf32>
      %39 = vector.extract %38[0, 0, 0] : f32 from vector<1x1x1xf32>
      %40 = tpu.iota {dimensions = array<i32: 0>} : vector<8x128xi32>
      %c0_i32_31 = arith.constant 0 : i32
      %41 = vector.broadcast %c0_i32_31 : i32 to vector<8x128xi32>
      %42 = arith.cmpi eq, %40, %41 : vector<8x128xi32>
      %c1_i32 = arith.constant 1 : i32
      %43 = vector.broadcast %c1_i32 : i32 to vector<8x128xi32>
      %44 = arith.cmpi eq, %40, %43 : vector<8x128xi32>
      %45 = vector.broadcast %34 : f32 to vector<8x128xf32>
      %46 = vector.broadcast %39 : f32 to vector<8x128xf32>
      %47 = arith.select %44, %45, %46 : vector<8x128xi1>, vector<8x128xf32>
      %48 = vector.broadcast %29 : f32 to vector<8x128xf32>
      %49 = arith.select %42, %48, %47 : vector<8x128xi1>, vector<8x128xf32>
      %c0_32 = arith.constant 0 : index
      %c0_33 = arith.constant 0 : index
      %c0_34 = arith.constant 0 : index
      %50 = vector.load %arg4[%c0_32, %c0_33, %c0_34] : memref<1x8x128xf32, #tpu.memory_space<vmem>>, vector<1x8x128xf32>
      %51 = vector.shape_cast %50 : vector<1x8x128xf32> to vector<8x128xf32>
      %52 = vector.shape_cast %49 : vector<8x128xf32> to vector<1x8x128xf32>
      tpu.vector_store %arg4[%c0_32, %c0_33, %c0_34], %52 {strides = array<i32>} : memref<1x8x128xf32, #tpu.memory_space<vmem>>, vector<1x8x128xf32>,
    } else {
    }
    return
  }
  func.func @transform_0(%arg0: i32, %arg1: i32) -> (i32, i32, i32) {
    %c0_i32 = arith.constant 0 : i32
    %c0_i32_0 = arith.constant 0 : i32
    return %arg0, %arg1, %c0_i32 : i32, i32, i32
  }
  func.func @transform_1(%arg0: i32, %arg1: i32) -> (i32, i32, i32) {
    %c0_i32 = arith.constant 0 : i32
    %c0_i32_0 = arith.constant 0 : i32
    return %arg0, %arg1, %c0_i32 : i32, i32, i32
  }
  func.func @transform_2(%arg0: i32, %arg1: i32) -> (i32, i32, i32) {
    %c0_i32 = arith.constant 0 : i32
    %c0_i32_0 = arith.constant 0 : i32
    %c0_i32_1 = arith.constant 0 : i32
    return %arg0, %c0_i32, %c0_i32_0 : i32, i32, i32
  }
}

</mosaic_0001>

<llo_original>
// kernel: tpu_custom_call.1
$region0: #{tpu_custom_call.1}
  #allocation0 [shape = 'u32[]', space=smem, size = 0x4, offset = 0x4, fixed_abs, tag = 'smem constant byte address 0x4 - core index']
  #allocation1 [shape = 'u32[144,128]{1,0:T(1,128)}', space=vmem, size = 0x12000, scoped, tag = 'internal scratch']
  #allocation2 [shape = 'f32[8,128]{1,0:T(8,128)}', space=vmem, size = 0x1000, scoped, tag = 'scratch operand']
  #allocation3 [shape = 'f32[8,128]{1,0:T(8,128)}', space=vmem, size = 0x1000, scoped, tag = 'scratch operand']
  #allocation4 [shape = 'f32[8,128]{1,0:T(8,128)}', space=vmem, size = 0x1000, scoped, tag = 'scratch operand']
  %s0 = inlined_call_operand.hbm [shape: f32[2,512,128], index: 0, kind: input, shape index: {}]
  %s1 = inlined_call_operand.hbm [shape: f32[2,512,128], index: 1, kind: input, shape index: {}]
  %s2 = inlined_call_operand.hbm [shape: f32[2,8,128], index: 2, kind: output, shape index: {}]
  %s3 = sld [smem:[#allocation0]]
  $region57: #{tpu_custom_call.1} parent=0
    _
  %s5 = ssub.s32 1, %s3
  %s6 = scalar_select 0, %s5, %s3
  $region1: #{tpu_custom_call.1} parent=0
    #allocation5 [shape = 'u8[524288]{0}', space=vmem, size = 0x80000, scoped, tag = 'input window, operand 0']
    #allocation6 [shape = 's32[2]{0}', space=sflag, size = 0x8, scoped, tag = 'scoped memory for tpu_custom_call.1']
    #allocation7 [shape = 's32[2]{0}', space=sflag, size = 0x8, scoped, tag = 'scoped memory for tpu_custom_call.1']
    #allocation8 [shape = 'u8[524288]{0}', space=vmem, size = 0x80000, scoped, tag = 'input window, operand 1']
    #allocation9 [shape = 's32[2]{0}', space=sflag, size = 0x8, scoped, tag = 'scoped memory for tpu_custom_call.1']
    #allocation10 [shape = 'u8[8192]{0}', space=vmem, size = 0x2000, scoped, tag = 'output window, operand 0']
    %7 = vsyncpa [#allocation6], 0
    %s8 = scalar_lea.sflag [#allocation6], 1
    %9 = vsyncpa %s8, 0
    %10 = vsyncpa [#allocation9], 0
    %s11 = scalar_lea.sflag [#allocation9], 1
    %12 = vsyncpa %s11, 0
    %13 = vsyncpa [#allocation7], 0
    %s14 = scalar_lea.sflag [#allocation7], 1
    %15 = vsyncpa %s14, 0
    loop: start=0, step=1, limit=4
    $region2: #{tpu_custom_call.1} parent=1 // loop_pre_header
      _
    $region3: #{tpu_custom_call.1} parent=1 // loop_header
      %s17 = sphi 0, %s21
      %p18 = scmp.ge.s32.totalorder %s17, 4
      %s24 = sphi 0, %s36
      %s25 = sphi 0, %s32
      %s26 = sphi 0, %s24
      %s27 = sphi 0, %s25
      %s28 = sphi 0, %s26
      %s29 = sphi 0, %s27
      %s41 = sphi 0, %s43
      %s44 = sphi 0, %s41
      %s45 = sphi 0, %s44
      %s61 = sphi 0, %s45
      %s69 = sphi 0, %s71
      %s72 = sphi 0, %s69
      %s73 = sphi 0, %s72
      %s89 = sphi 0, %s73
      %s95 = sphi 0, %s97
      %s98 = sphi 0, %s95
      %s99 = sphi 0, %s98
      %s115 = sphi 0, %s99
    $region4: #{tpu_custom_call.1} parent=1 // loop_header_branch
      %20 = sbr.rel (%p18) target = $region8
    $region5: #{tpu_custom_call.1} parent=1 // loop_body
      %s22 = ssub.s32 %s17, 1
      %s23 = ssub.s32 %s17, 2
      %s30 = sadd.s32 1, %s25
      %p31 = scmp.ge.s32.totalorder %s30, 1
      %s32 = scalar_select %p31, 0, %s30
      %s33 = sadd.s32 1, %s24
      %s34 = scalar_select %p31, %s33, %s24
      %p35 = scmp.ge.s32.totalorder %s34, 2
      %s36 = scalar_select %p35, 0, %s34
      %s37 = ssub.s32 %s24, %s36
      %s38 = ssub.s32 %s25, %s32
      %s39 = sor.u32 %s37, %s38
      %p40 = scmp.eq.s32.totalorder %s39, 0
      %s42 = sadd.s32 %s41, 1
      %s43 = scalar_select %p40, %s41, %s42
      %p46 = pneg %p40
      %p47 = scmp.eq.s32.totalorder %s17, 1
      %p48 = por %p46, %p47
      %p49 = scmp.ne.s32.totalorder %s41, %s44
      %p50 = scmp.eq.s32.totalorder %s17, 0
      %p51 = por %p49, %p50
      %p52 = scmp.ne.s32.totalorder %s41, %s44
      %p53 = scmp.eq.s32.totalorder %s22, 1
      %p54 = por %p52, %p53
      %p55 = scmp.ne.s32.totalorder %s44, %s45
      %p56 = scmp.eq.s32.totalorder %s22, 0
      %p57 = por %p55, %p56
      %p58 = scmp.ne.s32.totalorder %s44, %s45
      %p59 = scmp.eq.s32.totalorder %s23, 1
      %p60 = por %p58, %p59
      %p62 = scmp.ne.s32.totalorder %s45, %s61
      %p63 = scmp.eq.s32.totalorder %s23, 0
      %p64 = por %p62, %p63
      %s65 = ssub.s32 %s24, %s36
      %s66 = ssub.s32 %s25, %s32
      %s67 = sor.u32 %s65, %s66
      %p68 = scmp.eq.s32.totalorder %s67, 0
      %s70 = sadd.s32 %s69, 1
      %s71 = scalar_select %p68, %s69, %s70
      %p74 = pneg %p68
      %p75 = scmp.eq.s32.totalorder %s17, 1
      %p76 = por %p74, %p75
      %p77 = scmp.ne.s32.totalorder %s69, %s72
      %p78 = scmp.eq.s32.totalorder %s17, 0
      %p79 = por %p77, %p78
      %p80 = scmp.ne.s32.totalorder %s69, %s72
      %p81 = scmp.eq.s32.totalorder %s22, 1
      %p82 = por %p80, %p81
      %p83 = scmp.ne.s32.totalorder %s72, %s73
      %p84 = scmp.eq.s32.totalorder %s22, 0
      %p85 = por %p83, %p84
      %p86 = scmp.ne.s32.totalorder %s72, %s73
      %p87 = scmp.eq.s32.totalorder %s23, 1
      %p88 = por %p86, %p87
      %p90 = scmp.ne.s32.totalorder %s73, %s89
      %p91 = scmp.eq.s32.totalorder %s23, 0
      %p92 = por %p90, %p91
      %s93 = ssub.s32 %s24, %s36
      %p94 = scmp.eq.s32.totalorder %s93, 0
      %s96 = sadd.s32 %s95, 1
      %s97 = scalar_select %p94, %s95, %s96
      %p100 = pneg %p94
      %p101 = scmp.eq.s32.totalorder %s17, 1
      %p102 = por %p100, %p101
      %p103 = scmp.ne.s32.totalorder %s95, %s98
      %p104 = scmp.eq.s32.totalorder %s17, 0
      %p105 = por %p103, %p104
      %p106 = scmp.ne.s32.totalorder %s95, %s98
      %p107 = scmp.eq.s32.totalorder %s22, 1
      %p108 = por %p106, %p107
      %p109 = scmp.ne.s32.totalorder %s98, %s99
      %p110 = scmp.eq.s32.totalorder %s22, 0
      %p111 = por %p109, %p110
      %p112 = scmp.ne.s32.totalorder %s98, %s99
      %p113 = scmp.eq.s32.totalorder %s23, 1
      %p114 = por %p112, %p113
      %p116 = scmp.ne.s32.totalorder %s99, %s115
      %p117 = scmp.eq.s32.totalorder %s23, 0
      %p118 = por %p116, %p117
      %p119 = scmp.le.s32.totalorder 1, %s17
      %p120 = scmp.lt.s32.totalorder %s17, 3
      %p121 = pnand %p119, %p120
      %p122 = pneg %p121
      // Predicated region
      $region9: #{tpu_custom_call.1} parent=5 // pred_check
        _
      $region10: #{tpu_custom_call.1} parent=5 // pred_check_branch
        %124 = sbr.rel (%p121) target = $region12
      $region11: #{tpu_custom_call.1} parent=5 // pred_region
        %s125 = ssub.s32 %s17, 1
      $region12: #{tpu_custom_call.1} parent=5 // pred_fallthru
        _
      %p126 = scmp.lt.s32.totalorder %s17, 2
      // Predicated region
      $region13: #{tpu_custom_call.1} parent=5 // pred_check
        %p127 = pneg %p126
      $region14: #{tpu_custom_call.1} parent=5 // pred_check_branch
        %129 = sbr.rel (%p127) target = $region16
      $region15: #{tpu_custom_call.1} parent=5 // pred_region
        // Predicated region
        $region17: #{tpu_custom_call.1} parent=15 // pred_check
          %p130 = pneg %p51
        $region18: #{tpu_custom_call.1} parent=15 // pred_check_branch
          %132 = sbr.rel (%p130) target = $region20
        $region19: #{tpu_custom_call.1} parent=15 // pred_region
          %s133 = sand.u32 %s41, 1
          %s134 = scalar_lea.sflag [#allocation6], %s133
          %s135 = sand.u32 %s41, 1
          %s136 = smul.addr %s135, 512
          %s137 = scalar_lea.vmem [#allocation5], %s136
          %s138 = smul.u32 64, %s25
          %s140 = ssub.s32 8192, 8192
          %141 = vsyncadd %s134, %s140
          %s142 = smul.addr %s24, 64
          %s143 = sadd.s32 %s138, %s142
          %s144 = smul.addr %s143, 128
          %s145 = scalar_lea.hbm %s0, %s144
          %s146 = sshll.u32 %s137, 4
          %s147 = int_to_ptr.vmem [resolvable:$true] %s146
          %152 = dma.hbm_to_vmem [thread:$0]  %s145, 8192, %s147, %s134, 128, 128, 8
        $region20: #{tpu_custom_call.1} parent=15 // pred_fallthru
          _
        // Predicated region
        $region21: #{tpu_custom_call.1} parent=15 // pred_check
          %p153 = pneg %p79
        $region22: #{tpu_custom_call.1} parent=15 // pred_check_branch
          %155 = sbr.rel (%p153) target = $region24
        $region23: #{tpu_custom_call.1} parent=15 // pred_region
          %s156 = sand.u32 %s69, 1
          %s157 = scalar_lea.sflag [#allocation9], %s156
          %s158 = sand.u32 %s69, 1
          %s159 = smul.addr %s158, 512
          %s160 = scalar_lea.vmem [#allocation8], %s159
          %s161 = smul.u32 64, %s25
          %s163 = ssub.s32 8192, 8192
          %164 = vsyncadd %s157, %s163
          %s165 = smul.addr %s24, 64
          %s166 = sadd.s32 %s161, %s165
          %s167 = smul.addr %s166, 128
          %s168 = scalar_lea.hbm %s1, %s167
          %s169 = sshll.u32 %s160, 4
          %s170 = int_to_ptr.vmem [resolvable:$true] %s169
          %175 = dma.hbm_to_vmem [thread:$0]  %s168, 8192, %s170, %s157, 128, 128, 8
        $region24: #{tpu_custom_call.1} parent=15 // pred_fallthru
          _
      $region16: #{tpu_custom_call.1} parent=5 // pred_fallthru
        _
      %p176 = scmp.le.s32.totalorder 1, %s17
      %p177 = scmp.lt.s32.totalorder %s17, 3
      %p178 = pnand %p176, %p177
      %p179 = pneg %p178
      // Predicated region
      $region25: #{tpu_custom_call.1} parent=5 // pred_check
        _
      $region26: #{tpu_custom_call.1} parent=5 // pred_check_branch
        %181 = sbr.rel (%p178) target = $region28
      $region27: #{tpu_custom_call.1} parent=5 // pred_region
        %s182 = ssub.s32 %s17, 1
        %s183 = sand.u32 %s44, 1
        %s184 = scalar_lea.sflag [#allocation6], %s183
        %s185 = sand.u32 %s44, 1
        %s186 = smul.addr %s185, 512
        %s187 = scalar_lea.vmem [#allocation5], %s186
        // Predicated region
        $region29: #{tpu_custom_call.1} parent=27 // pred_check
          %p188 = pneg %p57
        $region30: #{tpu_custom_call.1} parent=27 // pred_check_branch
          %190 = sbr.rel (%p188) target = $region32
        $region31: #{tpu_custom_call.1} parent=27 // pred_region
          %191 = dma.done %s184, 8192
        $region32: #{tpu_custom_call.1} parent=27 // pred_fallthru
          _
        %s192 = sand.u32 %s72, 1
        %s193 = scalar_lea.sflag [#allocation9], %s192
        %s194 = sand.u32 %s72, 1
        %s195 = smul.addr %s194, 512
        %s196 = scalar_lea.vmem [#allocation8], %s195
        // Predicated region
        $region33: #{tpu_custom_call.1} parent=27 // pred_check
          %p197 = pneg %p85
        $region34: #{tpu_custom_call.1} parent=27 // pred_check_branch
          %199 = sbr.rel (%p197) target = $region36
        $region35: #{tpu_custom_call.1} parent=27 // pred_region
          %200 = dma.done %s193, 8192
        $region36: #{tpu_custom_call.1} parent=27 // pred_fallthru
          _
        %s201 = sand.u32 %s44, 1
        %s202 = scalar_lea.sflag [#allocation6], %s201
        %s203 = sand.u32 %s44, 1
        %s204 = smul.addr %s203, 512
        %s205 = scalar_lea.vmem [#allocation5], %s204
        %p206 = pneg %p57
        %p207 = pneg %p54
        %s208 = sand.u32 %s72, 1
        %s209 = scalar_lea.sflag [#allocation9], %s208
        %s210 = sand.u32 %s72, 1
        %s211 = smul.addr %s210, 512
        %s212 = scalar_lea.vmem [#allocation8], %s211
        %p213 = pneg %p85
        %p214 = pneg %p82
        %p215 = pneg %p111
        %p216 = pneg %p108
        %s217 = sand.u32 %s98, 1
        %s218 = scalar_lea.sflag [#allocation7], %s217
        %s219 = sand.u32 %s98, 1
        %s220 = smul.addr %s219, 8
        %s221 = scalar_lea.vmem [#allocation10], %s220
        %s222 = smul.u32 64, %s27
        %s223 = smul.u32 64, %s27
        %p224 = scmp.eq.s32.totalorder %s27, 0
        // Predicated region
        $region37: #{tpu_custom_call.1} parent=27 // pred_check
          %p225 = pneg %p224
        $region38: #{tpu_custom_call.1} parent=27 // pred_check_branch
          %227 = sbr.rel (%p225) target = $region40
        $region39: #{tpu_custom_call.1} parent=27 // pred_region
          %228 = vst [vmem:[#allocation2] sm:$0xff] 0.0
          %229 = vst [vmem:[#allocation3] sm:$0xff] 0.0
          %230 = vst [vmem:[#allocation4] sm:$0xff] 0.0
        $region40: #{tpu_custom_call.1} parent=27 // pred_fallthru
          _
        %v231 = vld [vmem:[%s187] sm:$0xff]
        %v232 = vld [vmem:[%s187 + $0x8] sm:$0xff]
        %v233 = vld [vmem:[%s187 + $0x10] sm:$0xff]
        %v234 = vld [vmem:[%s187 + $0x18] sm:$0xff]
        %v235 = vld [vmem:[%s187 + $0x20] sm:$0xff]
        %v236 = vld [vmem:[%s187 + $0x28] sm:$0xff]
        %v237 = vld [vmem:[%s187 + $0x30] sm:$0xff]
        %v238 = vld [vmem:[%s187 + $0x38] sm:$0xff]
        %v239 = vld [vmem:[%s187 + $0x40] sm:$0xff]
        %v240 = vld [vmem:[%s187 + $0x48] sm:$0xff]
        %v241 = vld [vmem:[%s187 + $0x50] sm:$0xff]
        %v242 = vld [vmem:[%s187 + $0x58] sm:$0xff]
        %v243 = vld [vmem:[%s187 + $0x60] sm:$0xff]
        %v244 = vld [vmem:[%s187 + $0x68] sm:$0xff]
        %v245 = vld [vmem:[%s187 + $0x70] sm:$0xff]
        %v246 = vld [vmem:[%s187 + $0x78] sm:$0xff]
        %v247 = vld [vmem:[%s187 + $0x80] sm:$0xff]
        %v248 = vld [vmem:[%s187 + $0x88] sm:$0xff]
        %v249 = vld [vmem:[%s187 + $0x90] sm:$0xff]
        %v250 = vld [vmem:[%s187 + $0x98] sm:$0xff]
        %v251 = vld [vmem:[%s187 + $0xa0] sm:$0xff]
        %v252 = vld [vmem:[%s187 + $0xa8] sm:$0xff]
        %v253 = vld [vmem:[%s187 + $0xb0] sm:$0xff]
        %v254 = vld [vmem:[%s187 + $0xb8] sm:$0xff]
        %v255 = vld [vmem:[%s187 + $0xc0] sm:$0xff]
        %v256 = vld [vmem:[%s187 + $0xc8] sm:$0xff]
        %v257 = vld [vmem:[%s187 + $0xd0] sm:$0xff]
        %v258 = vld [vmem:[%s187 + $0xd8] sm:$0xff]
        %v259 = vld [vmem:[%s187 + $0xe0] sm:$0xff]
        %v260 = vld [vmem:[%s187 + $0xe8] sm:$0xff]
        %v261 = vld [vmem:[%s187 + $0xf0] sm:$0xff]
        %v262 = vld [vmem:[%s187 + $0xf8] sm:$0xff]
        %v263 = vld [vmem:[%s187 + $0x100] sm:$0xff]
        %v264 = vld [vmem:[%s187 + $0x108] sm:$0xff]
        %v265 = vld [vmem:[%s187 + $0x110] sm:$0xff]
        %v266 = vld [vmem:[%s187 + $0x118] sm:$0xff]
        %v267 = vld [vmem:[%s187 + $0x120] sm:$0xff]
        %v268 = vld [vmem:[%s187 + $0x128] sm:$0xff]
        %v269 = vld [vmem:[%s187 + $0x130] sm:$0xff]
        %v270 = vld [vmem:[%s187 + $0x138] sm:$0xff]
        %v271 = vld [vmem:[%s187 + $0x140] sm:$0xff]
        %v272 = vld [vmem:[%s187 + $0x148] sm:$0xff]
        %v273 = vld [vmem:[%s187 + $0x150] sm:$0xff]
        %v274 = vld [vmem:[%s187 + $0x158] sm:$0xff]
        %v275 = vld [vmem:[%s187 + $0x160] sm:$0xff]
        %v276 = vld [vmem:[%s187 + $0x168] sm:$0xff]
        %v277 = vld [vmem:[%s187 + $0x170] sm:$0xff]
        %v278 = vld [vmem:[%s187 + $0x178] sm:$0xff]
        %v279 = vld [vmem:[%s187 + $0x180] sm:$0xff]
        %v280 = vld [vmem:[%s187 + $0x188] sm:$0xff]
        %v281 = vld [vmem:[%s187 + $0x190] sm:$0xff]
        %v282 = vld [vmem:[%s187 + $0x198] sm:$0xff]
        %v283 = vld [vmem:[%s187 + $0x1a0] sm:$0xff]
        %v284 = vld [vmem:[%s187 + $0x1a8] sm:$0xff]
        %v285 = vld [vmem:[%s187 + $0x1b0] sm:$0xff]
        %v286 = vld [vmem:[%s187 + $0x1b8] sm:$0xff]
        %v287 = vld [vmem:[%s187 + $0x1c0] sm:$0xff]
        %v288 = vld [vmem:[%s187 + $0x1c8] sm:$0xff]
        %v289 = vld [vmem:[%s187 + $0x1d0] sm:$0xff]
        %v290 = vld [vmem:[%s187 + $0x1d8] sm:$0xff]
        %v291 = vld [vmem:[%s187 + $0x1e0] sm:$0xff]
        %v292 = vld [vmem:[%s187 + $0x1e8] sm:$0xff]
        %v293 = vld [vmem:[%s187 + $0x1f0] sm:$0xff]
        %v294 = vld [vmem:[%s187 + $0x1f8] sm:$0xff]
        %v295 = vld [vmem:[%s196] sm:$0xff]
        %v296 = vld [vmem:[%s196 + $0x8] sm:$0xff]
        %v297 = vld [vmem:[%s196 + $0x10] sm:$0xff]
        %v298 = vld [vmem:[%s196 + $0x18] sm:$0xff]
        %v299 = vld [vmem:[%s196 + $0x20] sm:$0xff]
        %v300 = vld [vmem:[%s196 + $0x28] sm:$0xff]
        %v301 = vld [vmem:[%s196 + $0x30] sm:$0xff]
        %v302 = vld [vmem:[%s196 + $0x38] sm:$0xff]
        %v303 = vld [vmem:[%s196 + $0x40] sm:$0xff]
        %v304 = vld [vmem:[%s196 + $0x48] sm:$0xff]
        %v305 = vld [vmem:[%s196 + $0x50] sm:$0xff]
        %v306 = vld [vmem:[%s196 + $0x58] sm:$0xff]
        %v307 = vld [vmem:[%s196 + $0x60] sm:$0xff]
        %v308 = vld [vmem:[%s196 + $0x68] sm:$0xff]
        %v309 = vld [vmem:[%s196 + $0x70] sm:$0xff]
        %v310 = vld [vmem:[%s196 + $0x78] sm:$0xff]
        %v311 = vld [vmem:[%s196 + $0x80] sm:$0xff]
        %v312 = vld [vmem:[%s196 + $0x88] sm:$0xff]
        %v313 = vld [vmem:[%s196 + $0x90] sm:$0xff]
        %v314 = vld [vmem:[%s196 + $0x98] sm:$0xff]
        %v315 = vld [vmem:[%s196 + $0xa0] sm:$0xff]
        %v316 = vld [vmem:[%s196 + $0xa8] sm:$0xff]
        %v317 = vld [vmem:[%s196 + $0xb0] sm:$0xff]
        %v318 = vld [vmem:[%s196 + $0xb8] sm:$0xff]
        %v319 = vld [vmem:[%s196 + $0xc0] sm:$0xff]
        %v320 = vld [vmem:[%s196 + $0xc8] sm:$0xff]
        %v321 = vld [vmem:[%s196 + $0xd0] sm:$0xff]
        %v322 = vld [vmem:[%s196 + $0xd8] sm:$0xff]
        %v323 = vld [vmem:[%s196 + $0xe0] sm:$0xff]
        %v324 = vld [vmem:[%s196 + $0xe8] sm:$0xff]
        %v325 = vld [vmem:[%s196 + $0xf0] sm:$0xff]
        %v326 = vld [vmem:[%s196 + $0xf8] sm:$0xff]
        %v327 = vld [vmem:[%s196 + $0x100] sm:$0xff]
        %v328 = vld [vmem:[%s196 + $0x108] sm:$0xff]
        %v329 = vld [vmem:[%s196 + $0x110] sm:$0xff]
        %v330 = vld [vmem:[%s196 + $0x118] sm:$0xff]
        %v331 = vld [vmem:[%s196 + $0x120] sm:$0xff]
        %v332 = vld [vmem:[%s196 + $0x128] sm:$0xff]
        %v333 = vld [vmem:[%s196 + $0x130] sm:$0xff]
        %v334 = vld [vmem:[%s196 + $0x138] sm:$0xff]
        %v335 = vld [vmem:[%s196 + $0x140] sm:$0xff]
        %v336 = vld [vmem:[%s196 + $0x148] sm:$0xff]
        %v337 = vld [vmem:[%s196 + $0x150] sm:$0xff]
        %v338 = vld [vmem:[%s196 + $0x158] sm:$0xff]
        %v339 = vld [vmem:[%s196 + $0x160] sm:$0xff]
        %v340 = vld [vmem:[%s196 + $0x168] sm:$0xff]
        %v341 = vld [vmem:[%s196 + $0x170] sm:$0xff]
        %v342 = vld [vmem:[%s196 + $0x178] sm:$0xff]
        %v343 = vld [vmem:[%s196 + $0x180] sm:$0xff]
        %v344 = vld [vmem:[%s196 + $0x188] sm:$0xff]
        %v345 = vld [vmem:[%s196 + $0x190] sm:$0xff]
        %v346 = vld [vmem:[%s196 + $0x198] sm:$0xff]
        %v347 = vld [vmem:[%s196 + $0x1a0] sm:$0xff]
        %v348 = vld [vmem:[%s196 + $0x1a8] sm:$0xff]
        %v349 = vld [vmem:[%s196 + $0x1b0] sm:$0xff]
        %v350 = vld [vmem:[%s196 + $0x1b8] sm:$0xff]
        %v351 = vld [vmem:[%s196 + $0x1c0] sm:$0xff]
        %v352 = vld [vmem:[%s196 + $0x1c8] sm:$0xff]
        %v353 = vld [vmem:[%s196 + $0x1d0] sm:$0xff]
        %v354 = vld [vmem:[%s196 + $0x1d8] sm:$0xff]
        %v355 = vld [vmem:[%s196 + $0x1e0] sm:$0xff]
        %v356 = vld [vmem:[%s196 + $0x1e8] sm:$0xff]
        %v357 = vld [vmem:[%s196 + $0x1f0] sm:$0xff]
        %v358 = vld [vmem:[%s196 + $0x1f8] sm:$0xff]
        %v359 = vld [vmem:[#allocation2] sm:$0xff]
        %v360 = vadd.f32 %v231, %v232
        %v361 = vadd.f32 %v360, %v233
        %v362 = vadd.f32 %v361, %v234
        %v363 = vadd.f32 %v362, %v235
        %v364 = vadd.f32 %v363, %v236
        %v365 = vadd.f32 %v364, %v237
        %v366 = vadd.f32 %v365, %v238
        %v367 = vadd.f32 %v366, %v239
        %v368 = vadd.f32 %v367, %v240
        %v369 = vadd.f32 %v368, %v241
        %v370 = vadd.f32 %v369, %v242
        %v371 = vadd.f32 %v370, %v243
        %v372 = vadd.f32 %v371, %v244
        %v373 = vadd.f32 %v372, %v245
        %v374 = vadd.f32 %v373, %v246
        %v375 = vadd.f32 %v374, %v247
        %v376 = vadd.f32 %v375, %v248
        %v377 = vadd.f32 %v376, %v249
        %v378 = vadd.f32 %v377, %v250
        %v379 = vadd.f32 %v378, %v251
        %v380 = vadd.f32 %v379, %v252
        %v381 = vadd.f32 %v380, %v253
        %v382 = vadd.f32 %v381, %v254
        %v383 = vadd.f32 %v382, %v255
        %v384 = vadd.f32 %v383, %v256
        %v385 = vadd.f32 %v384, %v257
        %v386 = vadd.f32 %v385, %v258
        %v387 = vadd.f32 %v386, %v259
        %v388 = vadd.f32 %v387, %v260
        %v389 = vadd.f32 %v388, %v261
        %v390 = vadd.f32 %v389, %v262
        %v391 = vadd.f32 %v390, %v263
        %v392 = vadd.f32 %v391, %v264
        %v393 = vadd.f32 %v392, %v265
        %v394 = vadd.f32 %v393, %v266
        %v395 = vadd.f32 %v394, %v267
        %v396 = vadd.f32 %v395, %v268
        %v397 = vadd.f32 %v396, %v269
        %v398 = vadd.f32 %v397, %v270
        %v399 = vadd.f32 %v398, %v271
        %v400 = vadd.f32 %v399, %v272
        %v401 = vadd.f32 %v400, %v273
        %v402 = vadd.f32 %v401, %v274
        %v403 = vadd.f32 %v402, %v275
        %v404 = vadd.f32 %v403, %v276
        %v405 = vadd.f32 %v404, %v277
        %v406 = vadd.f32 %v405, %v278
        %v407 = vadd.f32 %v406, %v279
        %v408 = vadd.f32 %v407, %v280
        %v409 = vadd.f32 %v408, %v281
        %v410 = vadd.f32 %v409, %v282
        %v411 = vadd.f32 %v410, %v283
        %v412 = vadd.f32 %v411, %v284
        %v413 = vadd.f32 %v412, %v285
        %v414 = vadd.f32 %v413, %v286
        %v415 = vadd.f32 %v414, %v287
        %v416 = vadd.f32 %v415, %v288
        %v417 = vadd.f32 %v416, %v289
        %v418 = vadd.f32 %v417, %v290
        %v419 = vadd.f32 %v418, %v291
        %v420 = vadd.f32 %v419, %v292
        %v421 = vadd.f32 %v420, %v293
        %v422 = vadd.f32 %v421, %v294
        %v423 = vadd.f32 %v359, %v422
        %424 = vst [vmem:[#allocation2] sm:$0xff] %v423
        %v425 = vld [vmem:[#allocation3] sm:$0xff]
        %v426 = vadd.f32 %v295, %v296
        %v427 = vadd.f32 %v426, %v297
        %v428 = vadd.f32 %v427, %v298
        %v429 = vadd.f32 %v428, %v299
        %v430 = vadd.f32 %v429, %v300
        %v431 = vadd.f32 %v430, %v301
        %v432 = vadd.f32 %v431, %v302
        %v433 = vadd.f32 %v432, %v303
        %v434 = vadd.f32 %v433, %v304
        %v435 = vadd.f32 %v434, %v305
        %v436 = vadd.f32 %v435, %v306
        %v437 = vadd.f32 %v436, %v307
        %v438 = vadd.f32 %v437, %v308
        %v439 = vadd.f32 %v438, %v309
        %v440 = vadd.f32 %v439, %v310
        %v441 = vadd.f32 %v440, %v311
        %v442 = vadd.f32 %v441, %v312
        %v443 = vadd.f32 %v442, %v313
        %v444 = vadd.f32 %v443, %v314
        %v445 = vadd.f32 %v444, %v315
        %v446 = vadd.f32 %v445, %v316
        %v447 = vadd.f32 %v446, %v317
        %v448 = vadd.f32 %v447, %v318
        %v449 = vadd.f32 %v448, %v319
        %v450 = vadd.f32 %v449, %v320
        %v451 = vadd.f32 %v450, %v321
        %v452 = vadd.f32 %v451, %v322
        %v453 = vadd.f32 %v452, %v323
        %v454 = vadd.f32 %v453, %v324
        %v455 = vadd.f32 %v454, %v325
        %v456 = vadd.f32 %v455, %v326
        %v457 = vadd.f32 %v456, %v327
        %v458 = vadd.f32 %v457, %v328
        %v459 = vadd.f32 %v458, %v329
        %v460 = vadd.f32 %v459, %v330
        %v461 = vadd.f32 %v460, %v331
        %v462 = vadd.f32 %v461, %v332
        %v463 = vadd.f32 %v462, %v333
        %v464 = vadd.f32 %v463, %v334
        %v465 = vadd.f32 %v464, %v335
        %v466 = vadd.f32 %v465, %v336
        %v467 = vadd.f32 %v466, %v337
        %v468 = vadd.f32 %v467, %v338
        %v469 = vadd.f32 %v468, %v339
        %v470 = vadd.f32 %v469, %v340
        %v471 = vadd.f32 %v470, %v341
        %v472 = vadd.f32 %v471, %v342
        %v473 = vadd.f32 %v472, %v343
        %v474 = vadd.f32 %v473, %v344
        %v475 = vadd.f32 %v474, %v345
        %v476 = vadd.f32 %v475, %v346
        %v477 = vadd.f32 %v476, %v347
        %v478 = vadd.f32 %v477, %v348
        %v479 = vadd.f32 %v478, %v349
        %v480 = vadd.f32 %v479, %v350
        %v481 = vadd.f32 %v480, %v351
        %v482 = vadd.f32 %v481, %v352
        %v483 = vadd.f32 %v482, %v353
        %v484 = vadd.f32 %v483, %v354
        %v485 = vadd.f32 %v484, %v355
        %v486 = vadd.f32 %v485, %v356
        %v487 = vadd.f32 %v486, %v357
        %v488 = vadd.f32 %v487, %v358
        %v489 = vadd.f32 %v425, %v488
        %490 = vst [vmem:[#allocation3] sm:$0xff] %v489
        %v491 = vld [vmem:[#allocation4] sm:$0xff]
        %v492 = vmul.f32 %v231, %v295
        %v493 = vmul.f32 %v232, %v296
        %v494 = vmul.f32 %v233, %v297
        %v495 = vmul.f32 %v234, %v298
        %v496 = vmul.f32 %v235, %v299
        %v497 = vmul.f32 %v236, %v300
        %v498 = vmul.f32 %v237, %v301
        %v499 = vmul.f32 %v238, %v302
        %v500 = vmul.f32 %v239, %v303
        %v501 = vmul.f32 %v240, %v304
        %v502 = vmul.f32 %v241, %v305
        %v503 = vmul.f32 %v242, %v306
        %v504 = vmul.f32 %v243, %v307
        %v505 = vmul.f32 %v244, %v308
        %v506 = vmul.f32 %v245, %v309
        %v507 = vmul.f32 %v246, %v310
        %v508 = vmul.f32 %v247, %v311
        %v509 = vmul.f32 %v248, %v312
        %v510 = vmul.f32 %v249, %v313
        %v511 = vmul.f32 %v250, %v314
        %v512 = vmul.f32 %v251, %v315
        %v513 = vmul.f32 %v252, %v316
        %v514 = vmul.f32 %v253, %v317
        %v515 = vmul.f32 %v254, %v318
        %v516 = vmul.f32 %v255, %v319
        %v517 = vmul.f32 %v256, %v320
        %v518 = vmul.f32 %v257, %v321
        %v519 = vmul.f32 %v258, %v322
        %v520 = vmul.f32 %v259, %v323
        %v521 = vmul.f32 %v260, %v324
        %v522 = vmul.f32 %v261, %v325
        %v523 = vmul.f32 %v262, %v326
        %v524 = vmul.f32 %v263, %v327
        %v525 = vmul.f32 %v264, %v328
        %v526 = vmul.f32 %v265, %v329
        %v527 = vmul.f32 %v266, %v330
        %v528 = vmul.f32 %v267, %v331
        %v529 = vmul.f32 %v268, %v332
        %v530 = vmul.f32 %v269, %v333
        %v531 = vmul.f32 %v270, %v334
        %v532 = vmul.f32 %v271, %v335
        %v533 = vmul.f32 %v272, %v336
        %v534 = vmul.f32 %v273, %v337
        %v535 = vmul.f32 %v274, %v338
        %v536 = vmul.f32 %v275, %v339
        %v537 = vmul.f32 %v276, %v340
        %v538 = vmul.f32 %v277, %v341
        %v539 = vmul.f32 %v278, %v342
        %v540 = vmul.f32 %v279, %v343
        %v541 = vmul.f32 %v280, %v344
        %v542 = vmul.f32 %v281, %v345
        %v543 = vmul.f32 %v282, %v346
        %v544 = vmul.f32 %v283, %v347
        %v545 = vmul.f32 %v284, %v348
        %v546 = vmul.f32 %v285, %v349
        %v547 = vmul.f32 %v286, %v350
        %v548 = vmul.f32 %v287, %v351
        %v549 = vmul.f32 %v288, %v352
        %v550 = vmul.f32 %v289, %v353
        %v551 = vmul.f32 %v290, %v354
        %v552 = vmul.f32 %v291, %v355
        %v553 = vmul.f32 %v292, %v356
        %v554 = vmul.f32 %v293, %v357
        %v555 = vmul.f32 %v294, %v358
        %v556 = vadd.f32 %v492, %v493
        %v557 = vadd.f32 %v556, %v494
        %v558 = vadd.f32 %v557, %v495
        %v559 = vadd.f32 %v558, %v496
        %v560 = vadd.f32 %v559, %v497
        %v561 = vadd.f32 %v560, %v498
        %v562 = vadd.f32 %v561, %v499
        %v563 = vadd.f32 %v562, %v500
        %v564 = vadd.f32 %v563, %v501
        %v565 = vadd.f32 %v564, %v502
        %v566 = vadd.f32 %v565, %v503
        %v567 = vadd.f32 %v566, %v504
        %v568 = vadd.f32 %v567, %v505
        %v569 = vadd.f32 %v568, %v506
        %v570 = vadd.f32 %v569, %v507
        %v571 = vadd.f32 %v570, %v508
        %v572 = vadd.f32 %v571, %v509
        %v573 = vadd.f32 %v572, %v510
        %v574 = vadd.f32 %v573, %v511
        %v575 = vadd.f32 %v574, %v512
        %v576 = vadd.f32 %v575, %v513
        %v577 = vadd.f32 %v576, %v514
        %v578 = vadd.f32 %v577, %v515
        %v579 = vadd.f32 %v578, %v516
        %v580 = vadd.f32 %v579, %v517
        %v581 = vadd.f32 %v580, %v518
        %v582 = vadd.f32 %v581, %v519
        %v583 = vadd.f32 %v582, %v520
        %v584 = vadd.f32 %v583, %v521
        %v585 = vadd.f32 %v584, %v522
        %v586 = vadd.f32 %v585, %v523
        %v587 = vadd.f32 %v586, %v524
        %v588 = vadd.f32 %v587, %v525
        %v589 = vadd.f32 %v588, %v526
        %v590 = vadd.f32 %v589, %v527
        %v591 = vadd.f32 %v590, %v528
        %v592 = vadd.f32 %v591, %v529
        %v593 = vadd.f32 %v592, %v530
        %v594 = vadd.f32 %v593, %v531
        %v595 = vadd.f32 %v594, %v532
        %v596 = vadd.f32 %v595, %v533
        %v597 = vadd.f32 %v596, %v534
        %v598 = vadd.f32 %v597, %v535
        %v599 = vadd.f32 %v598, %v536
        %v600 = vadd.f32 %v599, %v537
        %v601 = vadd.f32 %v600, %v538
        %v602 = vadd.f32 %v601, %v539
        %v603 = vadd.f32 %v602, %v540
        %v604 = vadd.f32 %v603, %v541
        %v605 = vadd.f32 %v604, %v542
        %v606 = vadd.f32 %v605, %v543
        %v607 = vadd.f32 %v606, %v544
        %v608 = vadd.f32 %v607, %v545
        %v609 = vadd.f32 %v608, %v546
        %v610 = vadd.f32 %v609, %v547
        %v611 = vadd.f32 %v610, %v548
        %v612 = vadd.f32 %v611, %v549
        %v613 = vadd.f32 %v612, %v550
        %v614 = vadd.f32 %v613, %v551
        %v615 = vadd.f32 %v614, %v552
        %v616 = vadd.f32 %v615, %v553
        %v617 = vadd.f32 %v616, %v554
        %v618 = vadd.f32 %v617, %v555
        %v619 = vadd.f32 %v491, %v618
        %620 = vst [vmem:[#allocation4] sm:$0xff] %v619
        // Predicated region
        $region41: #{tpu_custom_call.1} parent=27 // pred_check
          %p621 = pneg %p224
        $region42: #{tpu_custom_call.1} parent=27 // pred_check_branch
          %623 = sbr.rel (%p621) target = $region44
        $region43: #{tpu_custom_call.1} parent=27 // pred_region
          %v624 = vld [vmem:[#allocation2] sm:$0xff]
          %625 = vadd.xlane.f32.xlu0 %v624
          %v626 = vpop.xlane.xlu0 %625
          %v627 = vrot.slane %v626, 4
          %v628 = vadd.f32 %v626, %v627
          %v629 = vrot.slane %v628, 2
          %v630 = vadd.f32 %v628, %v629
          %v631 = vrot.slane %v630, 1
          %v632 = vadd.f32 %v630, %v631
          %s633 = vtos %v632
          %v634 = vld [vmem:[#allocation3] sm:$0xff]
          %635 = vadd.xlane.f32.xlu0 %v634
          %v636 = vpop.xlane.xlu0 %635
          %v637 = vrot.slane %v636, 4
          %v638 = vadd.f32 %v636, %v637
          %v639 = vrot.slane %v638, 2
          %v640 = vadd.f32 %v638, %v639
          %v641 = vrot.slane %v640, 1
          %v642 = vadd.f32 %v640, %v641
          %s643 = vtos %v642
          %v644 = vld [vmem:[#allocation4] sm:$0xff]
          %645 = vadd.xlane.f32.xlu0 %v644
          %v646 = vpop.xlane.xlu0 %645
          %v647 = vrot.slane %v646, 4
          %v648 = vadd.f32 %v646, %v647
          %v649 = vrot.slane %v648, 2
          %v650 = vadd.f32 %v648, %v649
          %v651 = vrot.slane %v650, 1
          %v652 = vadd.f32 %v650, %v651
          %s653 = vtos %v652
          %v654 = vlaneseq
          %v655 = vshrl.u32 %v654, 7
          %vm656 = vcmp.eq.s32.totalorder %v655, 0
          %vm657 = vcmp.eq.s32.totalorder %v655, 1
          %v658 = vstv %s643
          %v659 = vstv %s653
          %v660 = vsel %vm657, %v658, %v659
          %v661 = vstv %s633
          %v662 = vsel %vm656, %v661, %v660
          %663 = vst [vmem:[%s221] sm:$0xff] %v662
        $region44: #{tpu_custom_call.1} parent=27 // pred_fallthru
          _
        %s664 = sand.u32 %s98, 1
        %s665 = scalar_lea.sflag [#allocation7], %s664
        %s666 = sand.u32 %s98, 1
        %s667 = smul.addr %s666, 8
        %s668 = scalar_lea.vmem [#allocation10], %s667
        // Predicated region
        $region45: #{tpu_custom_call.1} parent=27 // pred_check
          %p669 = pneg %p108
        $region46: #{tpu_custom_call.1} parent=27 // pred_check_branch
          %671 = sbr.rel (%p669) target = $region48
        $region47: #{tpu_custom_call.1} parent=27 // pred_region
          %s673 = ssub.s32 128, 128
          %674 = vsyncadd %s665, %s673
          %s675 = smul.addr %s26, 128
          %s676 = scalar_lea.hbm %s2, %s675
          %s678 = sshll.u32 %s668, 4
          %s679 = int_to_ptr.vmem [resolvable:$true] %s678
          %681 = dma.vmem_to_hbm [thread:$0]  %s679, 128, %s676, %s665
        $region48: #{tpu_custom_call.1} parent=27 // pred_fallthru
          _
      $region28: #{tpu_custom_call.1} parent=5 // pred_fallthru
        _
      %p682 = scmp.le.s32.totalorder 2, %s17
      // Predicated region
      $region49: #{tpu_custom_call.1} parent=5 // pred_check
        %p683 = pneg %p682
      $region50: #{tpu_custom_call.1} parent=5 // pred_check_branch
        %685 = sbr.rel (%p683) target = $region52
      $region51: #{tpu_custom_call.1} parent=5 // pred_region
        %s686 = ssub.s32 %s17, 2
        // Predicated region
        $region53: #{tpu_custom_call.1} parent=51 // pred_check
          %p687 = pneg %p114
        $region54: #{tpu_custom_call.1} parent=51 // pred_check_branch
          %689 = sbr.rel (%p687) target = $region56
        $region55: #{tpu_custom_call.1} parent=51 // pred_region
          %s690 = sand.u32 %s99, 1
          %s691 = scalar_lea.sflag [#allocation7], %s690
          %s692 = sand.u32 %s99, 1
          %s693 = smul.addr %s692, 8
          %s694 = scalar_lea.vmem [#allocation10], %s693
          %695 = dma.done %s691, 128
        $region56: #{tpu_custom_call.1} parent=51 // pred_fallthru
          _
      $region52: #{tpu_custom_call.1} parent=5 // pred_fallthru
        _
    $region6: #{tpu_custom_call.1} parent=1 // loop_footer
      %s21 = sadd.s32 1, %s17
    $region7: #{tpu_custom_call.1} parent=1 // loop_footer_branch
      %16 = sbr.rel target = $region3
    $region8: #{tpu_custom_call.1} parent=1 // loop_exit
      _
    %696 = vsyncpa [#allocation6], 1
    %s697 = scalar_lea.sflag [#allocation6], 1
    %698 = vsyncpa %s697, 1
    %699 = vsyncpa [#allocation9], 1
    %s700 = scalar_lea.sflag [#allocation9], 1
    %701 = vsyncpa %s700, 1
    %702 = vsyncpa [#allocation7], 1
    %s703 = scalar_lea.sflag [#allocation7], 1
    %704 = vsyncpa %s703, 1

</llo_original>
